<compile_context>
chip_gen: v6e
topology: v6e:2x2x1
jax: 0.10.0
libtpu: 0.0.40
codegen_flags: <defaults>
</compile_context>

<pallas_src>
import functools

import jax
import jax.numpy as jnp
from jax.experimental import pallas as pl
from jax.experimental.pallas import tpu as pltpu

_EPS = 1e-5
_LANES = 128
_STREAM_TILE_M = 512


def _vmem_capacity_bytes():
    """Best-effort query of per-core VMEM; conservative (v7x) fallback."""
    try:
        info = pltpu.get_tpu_info()
        cap = getattr(info, "vmem_capacity_bytes", None)
        if cap:
            return int(cap)
    except Exception:
        pass
    return 64 * 1024 * 1024


def _choose_tile_d(dp):
    for t in (512, 256, 128):
        if dp % t == 0:
            return t
    return 128  # unreachable: dp is always a multiple of 128


# --------------------------------------------------------------------------
# Kernels
# --------------------------------------------------------------------------
def _bn_resident_kernel(x_ref, gamma_ref, beta_ref, o_ref, *, n_rows, fold):
    """Whole reduction axis resident in VMEM: stats + affine in one pass."""
    x = x_ref[...].astype(jnp.float32)
    # Fused stats sweep: per-column sum and sum of squares (f32 accumulation).
    s = jnp.sum(x, axis=0, keepdims=True)
    q = jnp.sum(x * x, axis=0, keepdims=True)
    if fold > 1:
        # Lane-folded layout (D < 128): lanes hold `fold` groups of D features.
        # Combine the per-group partials with a 0/1 indicator matmul on the
        # (otherwise idle) MXU so every lane holds the full per-feature total.
        width = x.shape[1]                     # == 128
        dsub = width // fold                   # original D (a power of two)
        r = jax.lax.broadcasted_iota(jnp.int32, (width, width), 0)
        c = jax.lax.broadcasted_iota(jnp.int32, (width, width), 1)
        combine = ((r & (dsub - 1)) == (c & (dsub - 1))).astype(jnp.float32)
        sq = jnp.concatenate([s, q], axis=0)               # (2, width)
        sq = jnp.dot(sq, combine, preferred_element_type=jnp.float32)
        s, q = sq[0:1, :], sq[1:2, :]
    inv_n = 1.0 / float(n_rows)
    mean = s * inv_n
    var = jnp.maximum(q * inv_n - mean * mean, 0.0)        # biased variance
    inv_std = jax.lax.rsqrt(var + _EPS)
    # Single affine per element: y = x * scale + shift (no diff temp).
    scale = gamma_ref[...] * inv_std
    shift = beta_ref[...] - mean * scale
    o_ref[...] = (x * scale + shift).astype(o_ref.dtype)


def _bn_stats_kernel(x_ref, stats_ref):
    """Streaming pass 1: accumulate per-column sum / sumsq over the M axis."""
    @pl.when(pl.program_id(1) == 0)
    def _():
        stats_ref[...] = jnp.zeros_like(stats_ref)

    x = x_ref[...].astype(jnp.float32)
    s = jnp.sum(x, axis=0, keepdims=True)
    q = jnp.sum(x * x, axis=0, keepdims=True)
    stats_ref[...] += jnp.concatenate([s, q], axis=0)


def _bn_affine_kernel(x_ref, scale_ref, shift_ref, o_ref):
    """Streaming pass 2: y = x * scale + shift with precomputed per-column affine."""
    x = x_ref[...].astype(jnp.float32)
    o_ref[...] = (x * scale_ref[...] + shift_ref[...]).astype(o_ref.dtype)


# --------------------------------------------------------------------------
# Drivers
# --------------------------------------------------------------------------
def _prepare_layout(x2d, gamma, beta):
    """Returns (xp, gammap, betap, fold, dp) with a lane-friendly layout."""
    m, d = x2d.shape
    gamma = gamma.astype(jnp.float32)
    beta = beta.astype(jnp.float32)
    if d < _LANES and _LANES % d == 0:
        # Fold k = 128//d rows into the lane dimension -> lane-dense (., 128).
        fold = _LANES // d
        m_pad = ((m + fold - 1) // fold) * fold
        if m_pad != m:
            x2d = jnp.pad(x2d, ((0, m_pad - m), (0, 0)))   # zero rows: neutral
        xp = x2d.reshape(m_pad // fold, _LANES)
        return xp, jnp.tile(gamma, fold), jnp.tile(beta, fold), fold, _LANES
    dp = pl.cdiv(d, _LANES) * _LANES
    if dp != d:
        # Zero-pad features (padded columns are sliced off afterwards).
        xp = jnp.pad(x2d, ((0, 0), (0, dp - d)))
        gamma = jnp.pad(gamma, (0, dp - d), constant_values=1.0)
        beta = jnp.pad(beta, (0, dp - d))
    else:
        xp = x2d
    return xp, gamma, beta, 1, dp


def _run_resident(xp, gammap, betap, n_rows, fold, tile_d, cap):
    rows, dp = xp.shape
    need = rows * tile_d * (4 * xp.dtype.itemsize + 8) + (8 << 20)
    vmem_limit = int(min(cap, max(need, 32 << 20)))
    kernel = functools.partial(_bn_resident_kernel, n_rows=n_rows, fold=fold)
    return pl.pallas_call(
        kernel,
        out_shape=jax.ShapeDtypeStruct((rows, dp), xp.dtype),
        grid_spec=pltpu.PrefetchScalarGridSpec(
            num_scalar_prefetch=0,
            grid=(dp // tile_d,),
            in_specs=[
                pl.BlockSpec((rows, tile_d), lambda j: (0, j)),
                pl.BlockSpec((1, tile_d), lambda j: (0, j)),
                pl.BlockSpec((1, tile_d), lambda j: (0, j)),
            ],
            out_specs=pl.BlockSpec((rows, tile_d), lambda j: (0, j)),
        ),
        compiler_params=pltpu.CompilerParams(
            dimension_semantics=("parallel",),
            vmem_limit_bytes=vmem_limit,
        ),
    )(xp, gammap.reshape(1, dp), betap.reshape(1, dp))


def _run_streaming(xp, gammap, betap, n_rows, fold, tile_d, cap):
    rows, dp = xp.shape
    tile_m = _STREAM_TILE_M
    rows_pad = pl.cdiv(rows, tile_m) * tile_m
    if rows_pad != rows:
        # Zero rows contribute nothing to sum/sumsq (we divide by true n_rows).
        xp = jnp.pad(xp, ((0, rows_pad - rows), (0, 0)))
    nd, nm = dp // tile_d, rows_pad // tile_m
    vmem_limit = int(min(cap, 64 << 20))

    # ---- pass 1: per-column sum and sum-of-squares ------------------------
    stats = pl.pallas_call(
        _bn_stats_kernel,
        out_shape=jax.ShapeDtypeStruct((2, dp), jnp.float32),
        grid_spec=pltpu.PrefetchScalarGridSpec(
            num_scalar_prefetch=0,
            grid=(nd, nm),
            in_specs=[pl.BlockSpec((tile_m, tile_d), lambda j, i: (i, j))],
            out_specs=pl.BlockSpec((2, tile_d), lambda j, i: (0, j)),
        ),
        compiler_params=pltpu.CompilerParams(
            dimension_semantics=("parallel", "arbitrary"),
            vmem_limit_bytes=vmem_limit,
        ),
    )(xp)

    # ---- tiny per-feature affine parameters in plain JAX ------------------
    s, q = stats[0], stats[1]
    if fold > 1:
        dsub = dp // fold
        s = jnp.sum(s.reshape(fold, dsub), axis=0)
        q = jnp.sum(q.reshape(fold, dsub), axis=0)
        gamma1, beta1 = gammap[:dsub], betap[:dsub]
    else:
        gamma1, beta1 = gammap, betap
    inv_n = 1.0 / float(n_rows)
    mean = s * inv_n
    var = jnp.maximum(q * inv_n - mean * mean, 0.0)        # biased variance
    inv_std = jax.lax.rsqrt(var + _EPS)
    scale = gamma1 * inv_std
    shift = beta1 - mean * scale
    if fold > 1:
        scale = jnp.tile(scale, fold)
        shift = jnp.tile(shift, fold)

    # ---- pass 2: fully parallel affine normalisation ----------------------
    yp = pl.pallas_call(
        _bn_affine_kernel,
        out_shape=jax.ShapeDtypeStruct((rows_pad, dp), xp.dtype),
        grid_spec=pltpu.PrefetchScalarGridSpec(
            num_scalar_prefetch=0,
            grid=(nd, nm),
            in_specs=[
                pl.BlockSpec((tile_m, tile_d), lambda j, i: (i, j)),
                pl.BlockSpec((1, tile_d), lambda j, i: (0, j)),
                pl.BlockSpec((1, tile_d), lambda j, i: (0, j)),
            ],
            out_specs=pl.BlockSpec((tile_m, tile_d), lambda j, i: (i, j)),
        ),
        compiler_params=pltpu.CompilerParams(
            dimension_semantics=("parallel", "parallel"),
            vmem_limit_bytes=vmem_limit,
        ),
    )(xp, scale.reshape(1, dp), shift.reshape(1, dp))
    return yp[:rows]


def _bn_lastdim_2d(x2d, gamma, beta, *, force_streaming=False):
    """x2d: (M, D); gamma/beta: (D,). Returns (M, D)."""
    m, d = x2d.shape
    xp, gammap, betap, fold, dp = _prepare_layout(x2d, gamma, beta)
    rows = xp.shape[0]
    itemsize = x2d.dtype.itemsize
    cap = _vmem_capacity_bytes()
    budget = int(cap * 0.65)
    tile_d = _choose_tile_d(dp)

    def resident_need(td):
        # double-buffered input + output tiles plus f32 in-kernel temps
        return rows * td * (4 * itemsize + 8)

    use_resident = not force_streaming
    td = tile_d
    if use_resident:
        while td > 128 and resident_need(td) > budget:
            td //= 2
        use_resident = resident_need(td) <= budget

    if use_resident:
        yp = _run_resident(xp, gammap, betap, m, fold, td, cap)
    else:
        yp = _run_streaming(xp, gammap, betap, m, fold, tile_d, cap)

    if fold > 1:
        return yp.reshape(-1, d)[:m]
    if dp != d:
        return yp[:, :d]
    return yp


def batch_norm_last_dim(x, gamma, beta):
    """JAX/Pallas equivalent of BatchNormLastDim.forward (training-mode stats)."""
    if x.ndim == 2:
        return _bn_lastdim_2d(x, gamma, beta)
    elif x.ndim == 3:
        n, l, d = x.shape
        y = _bn_lastdim_2d(x.reshape(n * l, d), gamma, beta)
        return y.reshape(n, l, d)
    else:
        raise NotImplementedError(
            "BatchNormLastDim not implemented for ndim > 3 yet"
        )


def _reference(x, gamma, beta):
    """Pure-JAX reference mirroring torch BatchNorm1d training semantics."""
    if x.ndim == 3:
        n, l, d = x.shape
        xr = x.reshape(n * l, d)
    else:
        xr = x
        d = x.shape[-1]
    xf = xr.astype(jnp.float32)
    mean = jnp.mean(xf, axis=0, keepdims=True)
    var = jnp.mean((xf - mean) ** 2, axis=0, keepdims=True)  # biased
    y = (xf - mean) / jnp.sqrt(var + _EPS) * gamma.reshape(1, d) + beta.reshape(1, d)
    return y.reshape(x.shape).astype(x.dtype)


if __name__ == "__main__":
    key = jax.random.PRNGKey(0)
    k_x2, k_x3, k_g, k_b, k_xs, k_gs, k_bs = jax.random.split(key, 7)

    # ---- small shapes consistent with the module: BatchNorm1d(d=32) -------
    D = 32
    batch, seq = 2, 8
    gamma = 1.0 + 0.1 * jax.random.normal(k_g, (D,), dtype=jnp.float32)
    beta = 0.1 * jax.random.normal(k_b, (D,), dtype=jnp.float32)

    # 3D path (N, L, D): lane-folded resident kernel.
    x3 = jax.random.normal(k_x3, (batch, seq, D), dtype=jnp.float32)
    y3 = jax.block_until_ready(batch_norm_last_dim(x3, gamma, beta))
    assert y3.shape == x3.shape
    assert jnp.allclose(y3, _reference(x3, gamma, beta), atol=1e-5, rtol=1e-5)

    # 2D path (N, D).
    x2 = jax.random.normal(k_x2, (batch * seq, D), dtype=jnp.float32)
    y2 = jax.block_until_ready(batch_norm_last_dim(x2, gamma, beta))
    assert y2.shape == x2.shape
    assert jnp.allclose(y2, _reference(x2, gamma, beta), atol=1e-5, rtol=1e-5)

    # ---- exercise D-padding + the streaming (large-M) fallback cheaply ----
    Ds, Ms = 192, 700            # D not a multiple of 128, M not a tile multiple
    gs = 1.0 + 0.1 * jax.random.normal(k_gs, (Ds,), dtype=jnp.float32)
    bs = 0.1 * jax.random.normal(k_bs, (Ds,), dtype=jnp.float32)
    xs = jax.random.normal(k_xs, (Ms, Ds), dtype=jnp.float32)
    ref_s = _reference(xs, gs, bs)

    ys = jax.block_until_ready(_bn_lastdim_2d(xs, gs, bs, force_streaming=True))
    assert jnp.allclose(ys, ref_s, atol=1e-4, rtol=1e-4)

    yr = jax.block_until_ready(_bn_lastdim_2d(xs, gs, bs))  # resident, padded D
    assert jnp.allclose(yr, ref_s, atol=1e-4, rtol=1e-4)

    print("KERNEL_OK")
</pallas_src>

<mosaic_0001>
module attributes {stable_mosaic.version = 11 : i64} {
  func.func @_bn_resident_kernel(%arg0: i32, %arg1: memref<4x128xf32, #tpu.memory_space<vmem>>, %arg2: memref<1x128xf32, #tpu.memory_space<vmem>>, %arg3: memref<1x128xf32, #tpu.memory_space<vmem>>, %arg4: memref<4x128xf32, #tpu.memory_space<vmem>>) attributes {dimension_semantics = [#tpu.dimension_semantics<parallel>], iteration_bounds = array<i64: 1>, scalar_prefetch = 0 : i64, scratch_operands = 0 : i64, tpu.core_type = #tpu.core_type<tc>, window_params = [{transform_indices = @transform_0, window_bounds = array<i64: 4, 128>}, {transform_indices = @transform_1, window_bounds = array<i64: 1, 128>}, {transform_indices = @transform_2, window_bounds = array<i64: 1, 128>}, {transform_indices = @transform_3, window_bounds = array<i64: 4, 128>}]} {
    %c0 = arith.constant 0 : index
    %c0_0 = arith.constant 0 : index
    %0 = vector.load %arg1[%c0, %c0_0] : memref<4x128xf32, #tpu.memory_space<vmem>>, vector<4x128xf32>
    %cst = arith.constant dense<0.000000e+00> : vector<128xf32>
    %1 = vector.multi_reduction <add>, %0, %cst [0] : vector<4x128xf32> to vector<128xf32>
    %2 = vector.shape_cast %1 : vector<128xf32> to vector<1x128xf32>
    %3 = arith.mulf %0, %0 : vector<4x128xf32>
    %cst_1 = arith.constant dense<0.000000e+00> : vector<128xf32>
    %4 = vector.multi_reduction <add>, %3, %cst_1 [0] : vector<4x128xf32> to vector<128xf32>
    %5 = vector.shape_cast %4 : vector<128xf32> to vector<1x128xf32>
    %6 = tpu.iota {dimensions = array<i32: 0>} : vector<128x128xi32>
    %7 = tpu.iota {dimensions = array<i32: 1>} : vector<128x128xi32>
    %c31_i32 = arith.constant 31 : i32
    %8 = vector.broadcast %c31_i32 : i32 to vector<128x128xi32>
    %9 = arith.andi %6, %8 : vector<128x128xi32>
    %c31_i32_2 = arith.constant 31 : i32
    %10 = vector.broadcast %c31_i32_2 : i32 to vector<128x128xi32>
    %11 = arith.andi %7, %10 : vector<128x128xi32>
    %12 = arith.cmpi eq, %9, %11 : vector<128x128xi32>
    %13 = arith.extui %12 : vector<128x128xi1> to vector<128x128xi32>
    %14 = arith.sitofp %13 : vector<128x128xi32> to vector<128x128xf32>
    %15 = tpu.concatenate %2, %5 in 0 : vector<1x128xf32>, vector<1x128xf32> -> vector<2x128xf32>
    %cst_3 = arith.constant dense<0.000000e+00> : vector<2x128xf32>
    %16 = tpu.matmul %15, %14, %cst_3 {dimension_numbers = #tpu.dot_dimension_numbers<[1], [0], [0], [1], [0, 0, 1, 1], [], []>} : vector<2x128xf32>, vector<128x128xf32>, vector<2x128xf32> -> vector<2x128xf32>
    %17 = vector.extract_strided_slice %16 {offsets = [0, 0], sizes = [1, 128], strides = [1, 1]} : vector<2x128xf32> to vector<1x128xf32>
    %18 = vector.extract_strided_slice %16 {offsets = [1, 0], sizes = [1, 128], strides = [1, 1]} : vector<2x128xf32> to vector<1x128xf32>
    %cst_4 = arith.constant 6.250000e-02 : f32
    %19 = vector.broadcast %cst_4 : f32 to vector<1x128xf32>
    %20 = arith.mulf %17, %19 : vector<1x128xf32>
    %cst_5 = arith.constant 6.250000e-02 : f32
    %21 = vector.broadcast %cst_5 : f32 to vector<1x128xf32>
    %22 = arith.mulf %18, %21 : vector<1x128xf32>
    %23 = arith.mulf %20, %20 : vector<1x128xf32>
    %24 = arith.subf %22, %23 : vector<1x128xf32>
    %cst_6 = arith.constant 0.000000e+00 : f32
    %25 = vector.broadcast %cst_6 : f32 to vector<1x128xf32>
    %26 = arith.maximumf %24, %25 : vector<1x128xf32>
    %cst_7 = arith.constant 9.99999974E-6 : f32
    %27 = vector.broadcast %cst_7 : f32 to vector<1x128xf32>
    %28 = arith.addf %26, %27 : vector<1x128xf32>
    %29 = math.rsqrt %28 : vector<1x128xf32>
    %c0_8 = arith.constant 0 : index
    %c0_9 = arith.constant 0 : index
    %30 = vector.load %arg2[%c0_8, %c0_9] : memref<1x128xf32, #tpu.memory_space<vmem>>, vector<1x128xf32>
    %31 = arith.mulf %30, %29 : vector<1x128xf32>
    %c0_10 = arith.constant 0 : index
    %c0_11 = arith.constant 0 : index
    %32 = vector.load %arg3[%c0_10, %c0_11] : memref<1x128xf32, #tpu.memory_space<vmem>>, vector<1x128xf32>
    %33 = arith.mulf %20, %31 : vector<1x128xf32>
    %34 = arith.subf %32, %33 : vector<1x128xf32>
    %35 = vector.broadcast %31 : vector<1x128xf32> to vector<4x128xf32>
    %36 = arith.mulf %0, %35 : vector<4x128xf32>
    %37 = vector.broadcast %34 : vector<1x128xf32> to vector<4x128xf32>
    %38 = arith.addf %36, %37 : vector<4x128xf32>
    %c0_12 = arith.constant 0 : index
    %c0_13 = arith.constant 0 : index
    %39 = vector.load %arg4[%c0_12, %c0_13] : memref<4x128xf32, #tpu.memory_space<vmem>>, vector<4x128xf32>
    tpu.vector_store %arg4[%c0_12, %c0_13], %38 {strides = array<i32>} : memref<4x128xf32, #tpu.memory_space<vmem>>, vector<4x128xf32>,
    return
  }
  func.func @transform_0(%arg0: i32) -> (i32, i32) {
    %c0_i32 = arith.constant 0 : i32
    %c0_i32_0 = arith.constant 0 : i32
    return %c0_i32, %arg0 : i32, i32
  }
  func.func @transform_1(%arg0: i32) -> (i32, i32) {
    %c0_i32 = arith.constant 0 : i32
    %c0_i32_0 = arith.constant 0 : i32
    return %c0_i32, %arg0 : i32, i32
  }
  func.func @transform_2(%arg0: i32) -> (i32, i32) {
    %c0_i32 = arith.constant 0 : i32
    %c0_i32_0 = arith.constant 0 : i32
    return %c0_i32, %arg0 : i32, i32
  }
  func.func @transform_3(%arg0: i32) -> (i32, i32) {
    %c0_i32 = arith.constant 0 : i32
    %c0_i32_0 = arith.constant 0 : i32
    return %c0_i32, %arg0 : i32, i32
  }
}

</mosaic_0001>

<llo_original>
// kernel: tpu_custom_call.1
$region0: #{tpu_custom_call.1}
  #allocation0 [shape = 'u32[]', space=smem, size = 0x4, offset = 0x4, fixed_abs, tag = 'smem constant byte address 0x4 - core index']
  #allocation1 [shape = 'u32[144,128]{1,0:T(1,128)}', space=vmem, size = 0x12000, scoped, tag = 'internal scratch']
  %s0 = inlined_call_operand.hbm [shape: f32[4,128], index: 0, kind: input, shape index: {}]
  %s1 = inlined_call_operand.vmem [shape: f32[1,128], index: 1, kind: input, shape index: {}]
  %s2 = inlined_call_operand.vmem [shape: f32[1,128], index: 2, kind: input, shape index: {}]
  %s3 = inlined_call_operand.hbm [shape: f32[4,128], index: 3, kind: output, shape index: {}]
  %s4 = sld [smem:[#allocation0]]
  $region26: #{tpu_custom_call.1} parent=0
    _
  %s6 = ssub.s32 1, %s4
  %s7 = scalar_select 0, %s6, %s4
  $region1: #{tpu_custom_call.1} parent=0
    #allocation2 [shape = 'u8[2048]{0}', space=vmem, size = 0x800, scoped, tag = 'input window, operand 0, single buffered']
    #allocation3 [shape = 's32[1]{0}', space=sflag, size = 0x4, scoped, tag = 'scoped memory for tpu_custom_call.1']
    #allocation4 [shape = 's32[1]{0}', space=sflag, size = 0x4, scoped, tag = 'scoped memory for tpu_custom_call.1']
    #allocation5 [shape = 'u8[2048]{0}', space=vmem, size = 0x800, scoped, tag = 'output window, operand 0, single buffered']
    %8 = vsyncpa [#allocation3], 0
    %9 = vsyncpa [#allocation4], 0
    // Predicated region
    $region2: #{tpu_custom_call.1} parent=1 // pred_check
      _
    $region3: #{tpu_custom_call.1} parent=1 // pred_check_branch
      %11 = sbr.rel (0) target = $region5
    $region4: #{tpu_custom_call.1} parent=1 // pred_region
      %s13 = ssub.s32 64, 64
      %14 = vsyncadd [#allocation3], %s13
      %s16 = sshll.u32 [#allocation2], 4
      %s17 = int_to_ptr.vmem [resolvable:$true] %s16
      %19 = dma.hbm_to_vmem [thread:$0]  %s0, 64, %s17, [#allocation3]
    $region5: #{tpu_custom_call.1} parent=1 // pred_fallthru
      _
    // Predicated region
    $region6: #{tpu_custom_call.1} parent=1 // pred_check
      _
    $region7: #{tpu_custom_call.1} parent=1 // pred_check_branch
      %21 = sbr.rel (0) target = $region9
    $region8: #{tpu_custom_call.1} parent=1 // pred_region
      _
    $region9: #{tpu_custom_call.1} parent=1 // pred_fallthru
      _
    // Predicated region
    $region10: #{tpu_custom_call.1} parent=1 // pred_check
      _
    $region11: #{tpu_custom_call.1} parent=1 // pred_check_branch
      %23 = sbr.rel (0) target = $region13
    $region12: #{tpu_custom_call.1} parent=1 // pred_region
      _
    $region13: #{tpu_custom_call.1} parent=1 // pred_fallthru
      _
    // Predicated region
    $region14: #{tpu_custom_call.1} parent=1 // pred_check
      _
    $region15: #{tpu_custom_call.1} parent=1 // pred_check_branch
      %25 = sbr.rel (0) target = $region17
    $region16: #{tpu_custom_call.1} parent=1 // pred_region
      %26 = dma.done [#allocation3], 64
    $region17: #{tpu_custom_call.1} parent=1 // pred_fallthru
      _
    %v27 = vld [vmem:[#allocation2] sm:$0xf]
    %vm28 = vcmask 1043456
    %v29 = vsel %vm28, %v27, 0.0
    %v30 = vrot.slane %v29, 4
    %v31 = vadd.f32 %v29, %v30
    %v32 = vrot.slane %v31, 2
    %v33 = vadd.f32 %v31, %v32
    %v34 = vrot.slane %v33, 1
    %v35 = vadd.f32 %v33, %v34
    %v36 = vmul.f32 %v27, %v27
    %v37 = vsel %vm28, %v36, 0.0
    %v38 = vrot.slane %v37, 4
    %v39 = vadd.f32 %v37, %v38
    %v40 = vrot.slane %v39, 2
    %v41 = vadd.f32 %v39, %v40
    %v42 = vrot.slane %v41, 1
    %v43 = vadd.f32 %v41, %v42
    %v44 = vlaneseq
    %v45 = vshrl.u32 %v44, 7
    %v46 = vadd.s32 %v45, 8
    %v47 = vadd.s32 %v45, 16
    %v48 = vadd.s32 %v45, 24
    %v49 = vadd.s32 %v45, 32
    %v50 = vadd.s32 %v45, 40
    %v51 = vadd.s32 %v45, 48
    %v52 = vadd.s32 %v45, 56
    %v53 = vadd.s32 %v45, 64
    %v54 = vadd.s32 %v45, 72
    %v55 = vadd.s32 %v45, 80
    %v56 = vadd.s32 %v45, 88
    %v57 = vadd.s32 %v45, 96
    %v58 = vadd.s32 %v45, 104
    %v59 = vadd.s32 %v45, 112
    %v60 = vadd.s32 %v45, 120
    %v61 = vlaneseq
    %v62 = vand.u32 %v61, 127
    %v63 = vand.u32 %v45, 31
    %v64 = vand.u32 %v46, 31
    %v65 = vand.u32 %v47, 31
    %v66 = vand.u32 %v48, 31
    %v67 = vand.u32 %v49, 31
    %v68 = vand.u32 %v50, 31
    %v69 = vand.u32 %v51, 31
    %v70 = vand.u32 %v52, 31
    %v71 = vand.u32 %v53, 31
    %v72 = vand.u32 %v54, 31
    %v73 = vand.u32 %v55, 31
    %v74 = vand.u32 %v56, 31
    %v75 = vand.u32 %v57, 31
    %v76 = vand.u32 %v58, 31
    %v77 = vand.u32 %v59, 31
    %v78 = vand.u32 %v60, 31
    %v79 = vand.u32 %v62, 31
    %vm80 = vcmp.eq.s32.totalorder %v63, %v79
    %vm81 = vcmp.eq.s32.totalorder %v64, %v79
    %vm82 = vcmp.eq.s32.totalorder %v65, %v79
    %vm83 = vcmp.eq.s32.totalorder %v66, %v79
    %vm84 = vcmp.eq.s32.totalorder %v67, %v79
    %vm85 = vcmp.eq.s32.totalorder %v68, %v79
    %vm86 = vcmp.eq.s32.totalorder %v69, %v79
    %vm87 = vcmp.eq.s32.totalorder %v70, %v79
    %vm88 = vcmp.eq.s32.totalorder %v71, %v79
    %vm89 = vcmp.eq.s32.totalorder %v72, %v79
    %vm90 = vcmp.eq.s32.totalorder %v73, %v79
    %vm91 = vcmp.eq.s32.totalorder %v74, %v79
    %vm92 = vcmp.eq.s32.totalorder %v75, %v79
    %vm93 = vcmp.eq.s32.totalorder %v76, %v79
    %vm94 = vcmp.eq.s32.totalorder %v77, %v79
    %vm95 = vcmp.eq.s32.totalorder %v78, %v79
    %v96 = vsel %vm80, 1, 0
    %v97 = vsel %vm81, 1, 0
    %v98 = vsel %vm82, 1, 0
    %v99 = vsel %vm83, 1, 0
    %v100 = vsel %vm84, 1, 0
    %v101 = vsel %vm85, 1, 0
    %v102 = vsel %vm86, 1, 0
    %v103 = vsel %vm87, 1, 0
    %v104 = vsel %vm88, 1, 0
    %v105 = vsel %vm89, 1, 0
    %v106 = vsel %vm90, 1, 0
    %v107 = vsel %vm91, 1, 0
    %v108 = vsel %vm92, 1, 0
    %v109 = vsel %vm93, 1, 0
    %v110 = vsel %vm94, 1, 0
    %v111 = vsel %vm95, 1, 0
    %v112 = vcvt.s32.f32 %v96
    %v113 = vcvt.s32.f32 %v97
    %v114 = vcvt.s32.f32 %v98
    %v115 = vcvt.s32.f32 %v99
    %v116 = vcvt.s32.f32 %v100
    %v117 = vcvt.s32.f32 %v101
    %v118 = vcvt.s32.f32 %v102
    %v119 = vcvt.s32.f32 %v103
    %v120 = vcvt.s32.f32 %v104
    %v121 = vcvt.s32.f32 %v105
    %v122 = vcvt.s32.f32 %v106
    %v123 = vcvt.s32.f32 %v107
    %v124 = vcvt.s32.f32 %v108
    %v125 = vcvt.s32.f32 %v109
    %v126 = vcvt.s32.f32 %v110
    %v127 = vcvt.s32.f32 %v111
    %vm128 = vcmask 1040384
    %v129 = vsel %vm128, %v35, %v43
    %130 = vmatprep.subr.mxu0 0.0
    %131 = vmatpush1.msra.mxu0 %v127
    %132 = vmatprep.subr.mxu0 0.0
    %133 = vmatpush1.msra.mxu0 %v126
    %134 = vmatprep.subr.mxu0 0.0
    %135 = vmatpush1.msra.mxu0 %v125
    %136 = vmatprep.subr.mxu0 0.0
    %137 = vmatpush1.msra.mxu0 %v124
    %138 = vmatprep.subr.mxu0 0.0
    %139 = vmatpush1.msra.mxu0 %v123
    %140 = vmatprep.subr.mxu0 0.0
    %141 = vmatpush1.msra.mxu0 %v122
    %142 = vmatprep.subr.mxu0 0.0
    %143 = vmatpush1.msra.mxu0 %v121
    %144 = vmatprep.subr.mxu0 0.0
    %145 = vmatpush1.msra.mxu0 %v120
    %146 = vmatprep.subr.mxu0 0.0
    %147 = vmatpush1.msra.mxu0 %v119
    %148 = vmatprep.subr.mxu0 0.0
    %149 = vmatpush1.msra.mxu0 %v118
    %150 = vmatprep.subr.mxu0 0.0
    %151 = vmatpush1.msra.mxu0 %v117
    %152 = vmatprep.subr.mxu0 0.0
    %153 = vmatpush1.msra.mxu0 %v116
    %154 = vmatprep.subr.mxu0 0.0
    %155 = vmatpush1.msra.mxu0 %v115
    %156 = vmatprep.subr.mxu0 0.0
    %157 = vmatpush1.msra.mxu0 %v114
    %158 = vmatprep.subr.mxu0 0.0
    %159 = vmatpush1.msra.mxu0 %v113
    %160 = vmatprep.subr.mxu0 0.0
    %161 = vmatpush1.msra.mxu0 %v112
    %162 = vmatprep.subr.mxu0 0.0
    %163 = vmatpush2.msra.mxu0 0.0
    %164 = vmatprep.subr.mxu0 0.0
    %165 = vmatpush2.msra.mxu0 0.0
    %166 = vmatprep.subr.mxu0 0.0
    %167 = vmatpush2.msra.mxu0 0.0
    %168 = vmatprep.subr.mxu0 0.0
    %169 = vmatpush2.msra.mxu0 0.0
    %170 = vmatprep.subr.mxu0 0.0
    %171 = vmatpush2.msra.mxu0 0.0
    %172 = vmatprep.subr.mxu0 0.0
    %173 = vmatpush2.msra.mxu0 0.0
    %174 = vmatprep.subr.mxu0 0.0
    %175 = vmatpush2.msra.mxu0 0.0
    %176 = vmatprep.subr.mxu0 0.0
    %177 = vmatpush2.msra.mxu0 0.0
    %178 = vmatprep.subr.mxu0 0.0
    %179 = vmatpush2.msra.mxu0 0.0
    %180 = vmatprep.subr.mxu0 0.0
    %181 = vmatpush2.msra.mxu0 0.0
    %182 = vmatprep.subr.mxu0 0.0
    %183 = vmatpush2.msra.mxu0 0.0
    %184 = vmatprep.subr.mxu0 0.0
    %185 = vmatpush2.msra.mxu0 0.0
    %186 = vmatprep.subr.mxu0 0.0
    %187 = vmatpush2.msra.mxu0 0.0
    %188 = vmatprep.subr.mxu0 0.0
    %189 = vmatpush2.msra.mxu0 0.0
    %190 = vmatprep.subr.mxu0 0.0
    %191 = vmatpush2.msra.mxu0 0.0
    %192 = vmatprep.subr.mxu0 0.0
    %193 = vmatpush2.msra.mxu0 0.0
    %194 = vmatprep.mubr.f32.mxu0 0.0
    %195 = vmatmul.mubr.f32.gmra.mxu0 %v129
    %v196 = vpop.f32.mrf.mxu0
    %v197 = vadd.f32 0.0, %v196
    %v198 = vpop.f32.mrf.mxu0
    %199 = vdwg.mxu0
    %v200 = vmul.f32 %v197, 0.0625
    %v201 = vmul.f32 %v200, %v200
    %v203 = vrot.slane %v201, 7
    %v205 = vsub.f32 %v200, %v203
    %v206 = vmax.f32 %v205, 0.0
    %v207 = vadd.f32 %v206, 1e-05
    %v208 = vrsqrt.pop %v207
    %v209 = vld [vmem:[%s1] sm:$0x1]
    %v212 = vunpack.c.l.s4 1966171168
    %v213 = vunpack.c.0.s8 %v212
    %v214 = vlaneseq
    %v215 = vshrl.u32 %v214, 7
    %v216 = vsub.s32 %v213, %v215
    %v217 = vrot.slane %v208, %v216
    %v218 = vcombine.high %v217, %v217
    %v220 = vunpack.c.l.s4 1966171168
    %v221 = vunpack.c.0.s8 %v220
    %v222 = vlaneseq
    %v223 = vshrl.u32 %v222, 7
    %v224 = vsub.s32 %v221, %v223
    %v225 = vrot.slane %v218, %v224
    %v227 = vmul.f32 %v209, %v225
    %v228 = vld [vmem:[%s2] sm:$0x1]
    %v229 = vmul.f32 %v200, %v227
    %v230 = vsub.f32 %v228, %v229
    %v232 = vlaneseq
    %v233 = vshrl.u32 %v232, 7
    %v234 = vsub.s32 0, %v233
    %v235 = vrot.slane %v227, %v234
    %v237 = vmul.f32 %v27, %v235
    %v239 = vlaneseq
    %v240 = vshrl.u32 %v239, 7
    %v241 = vsub.s32 0, %v240
    %v242 = vrot.slane %v230, %v241
    %v244 = vadd.f32 %v237, %v242
    %245 = vst [vmem:[#allocation5] sm:$0xf] %v244
    // Predicated region
    $region18: #{tpu_custom_call.1} parent=1 // pred_check
      _
    $region19: #{tpu_custom_call.1} parent=1 // pred_check_branch
      %247 = sbr.rel (0) target = $region21
    $region20: #{tpu_custom_call.1} parent=1 // pred_region
      %s249 = ssub.s32 64, 64
      %250 = vsyncadd [#allocation4], %s249
      %s252 = sshll.u32 [#allocation5], 4
      %s253 = int_to_ptr.vmem [resolvable:$true] %s252
      %255 = dma.vmem_to_hbm [thread:$0]  %s253, 64, %s3, [#allocation4]
    $region21: #{tpu_custom_call.1} parent=1 // pred_fallthru
      _
    // Predicated region
    $region22: #{tpu_custom_call.1} parent=1 // pred_check
      _
    $region23: #{tpu_custom_call.1} parent=1 // pred_check_branch
      %257 = sbr.rel (0) target = $region25
    $region24: #{tpu_custom_call.1} parent=1 // pred_region
      %258 = dma.done [#allocation4], 64
    $region25: #{tpu_custom_call.1} parent=1 // pred_fallthru
      _
    %259 = vsyncpa [#allocation3], 1
    %260 = vsyncpa [#allocation4], 1

</llo_original>
